<compile_context>
chip_gen: v6e
topology: v6e:2x2x1
jax: 0.10.0
libtpu: 0.0.40
codegen_flags: <defaults>
</compile_context>

<pallas_src>
import math
import functools

import numpy as np
import jax
import jax.numpy as jnp
from jax import lax
from jax.experimental import pallas as pl
from jax.experimental.pallas import tpu as pltpu


# ----------------------------------------------------------------------------
# Host-side precomputed operators (constants w.r.t. the data)
# ----------------------------------------------------------------------------
def _pool_matrix(h_in, n):
    """(n*n, h_in*h_in) averaging matrix replicating nn.AdaptiveAvgPool2d((n,n)).
    Every row sums to 1 (needed for the pool <-> Linear2 commutation)."""
    P = np.zeros((n * n, h_in * h_in), np.float32)
    for oy in range(n):
        ys, ye = (oy * h_in) // n, -((-(oy + 1) * h_in) // n)
        for ox in range(n):
            xs, xe = (ox * h_in) // n, -((-(ox + 1) * h_in) // n)
            w = 1.0 / ((ye - ys) * (xe - xs))
            for yy in range(ys, ye):
                for xx in range(xs, xe):
                    P[oy * n + ox, yy * h_in + xx] = w
    return jnp.asarray(P)


def _shift_matrices(n):
    """Stacked (9*n*n, n*n) 0/1 matrices: tap k = dy*3+dx picks the in-bounds
    (oy+dy-1, ox+dx-1) neighbour of each output token (zero at the border),
    i.e. a depthwise 3x3 conv with padding=1 expressed on flat tokens."""
    S = np.zeros((9, n * n, n * n), np.float32)
    for dy in range(3):
        for dx in range(3):
            k = dy * 3 + dx
            for oy in range(n):
                for ox in range(n):
                    iy, ix = oy + dy - 1, ox + dx - 1
                    if 0 <= iy < n and 0 <= ix < n:
                        S[k, oy * n + ox, iy * n + ix] = 1.0
    return jnp.asarray(S.reshape(9 * n * n, n * n))


# ----------------------------------------------------------------------------
# Fused kernel: Linear -> GELU -> pool -> Linear -> PEG dw-conv + residual
# One grid step processes one image (all of its t_in tokens stay in VMEM).
# ----------------------------------------------------------------------------
def _ldp_fused_kernel(x_ref, w1_ref, b1_ref, w2_ref, b2_ref,
                      pmat_ref, smat_ref, wc_ref, bc_ref, o_ref, *, n2):
    # ---- FeatureIRLayer part 1: Linear -> GELU (exact erf, == torch nn.GELU)
    x = x_ref[...]                                                    # (t_in, inc) bf16
    h = jnp.dot(x, w1_ref[...], preferred_element_type=jnp.float32) + b1_ref[...]
    h = 0.5 * h * (1.0 + lax.erf(h * jnp.float32(1.0 / math.sqrt(2.0))))

    # ---- TokenDownLayer hoisted before Linear2 (exact: pool rows sum to 1)
    pooled_h = jnp.dot(pmat_ref[...], h,
                       preferred_element_type=jnp.float32)            # (n2, ouc) f32

    # ---- FeatureIRLayer part 2: Linear on the (already pooled) tokens
    pooled = jnp.dot(pooled_h.astype(jnp.bfloat16), w2_ref[...],
                     preferred_element_type=jnp.float32) + b2_ref[...]  # (n2, ouc)

    # ---- PosInjectLayer: depthwise 3x3 conv (pad=1) + bias + residual
    shifted = jnp.dot(smat_ref[...], pooled,
                      preferred_element_type=jnp.float32)              # (9*n2, ouc)
    wcs = wc_ref[...]                                                  # (9, ouc)
    acc = pooled + bc_ref[...]                                         # residual + bias
    for k in range(9):
        acc = acc + shifted[k * n2:(k + 1) * n2, :] * wcs[k:k + 1, :]
    o_ref[...] = acc.astype(o_ref.dtype)


def ldpnetv2_forward(params, x):
    B, t_in, inc = x.shape
    h_in = int(math.sqrt(t_in))
    assert h_in * h_in == t_in
    ouc = params["w1"].shape[1]
    n = params["n_tokens"]
    n2 = n * n

    pmat = _pool_matrix(h_in, n)            # (n2, t_in)  f32
    smat = _shift_matrices(n)               # (9*n2, n2)  f32

    # bf16 operands for the MXU (f32 accumulation inside the kernel).
    x2d = x.reshape(B * t_in, inc).astype(jnp.bfloat16)
    w1 = params["w1"].astype(jnp.bfloat16)
    w2 = params["w2"].astype(jnp.bfloat16)

    kern = functools.partial(_ldp_fused_kernel, n2=n2)
    out = pl.pallas_call(
        kern,
        out_shape=jax.ShapeDtypeStruct((B * n2, ouc), jnp.float32),
        grid_spec=pltpu.PrefetchScalarGridSpec(
            num_scalar_prefetch=0,
            grid=(B,),
            in_specs=[
                pl.BlockSpec((t_in, inc), lambda b: (b, 0)),     # x   (per image)
                pl.BlockSpec((inc, ouc), lambda b: (0, 0)),      # w1  (resident)
                pl.BlockSpec((1, ouc), lambda b: (0, 0)),        # b1
                pl.BlockSpec((ouc, ouc), lambda b: (0, 0)),      # w2
                pl.BlockSpec((1, ouc), lambda b: (0, 0)),        # b2
                pl.BlockSpec((n2, t_in), lambda b: (0, 0)),      # pooling matrix
                pl.BlockSpec((9 * n2, n2), lambda b: (0, 0)),    # shift matrices
                pl.BlockSpec((9, ouc), lambda b: (0, 0)),        # conv weights
                pl.BlockSpec((1, ouc), lambda b: (0, 0)),        # conv bias
            ],
            out_specs=pl.BlockSpec((n2, ouc), lambda b: (b, 0)),
        ),
        compiler_params=pltpu.CompilerParams(
            dimension_semantics=("parallel",)),
    )(x2d, w1, params["b1"], w2, params["b2"], pmat, smat,
      params["wc"], params["bc"])
    return out.reshape(B, n2, ouc)


# ----------------------------------------------------------------------------
# Pure-JAX f32 reference (mirrors the torch forward semantics literally:
# MLP -> AdaptiveAvgPool2d -> depthwise 3x3 conv + residual)
# ----------------------------------------------------------------------------
def ldpnetv2_reference(params, x):
    B, t_in, inc = x.shape
    h_in = int(math.sqrt(t_in))
    ouc = params["w1"].shape[1]
    n = params["n_tokens"]

    h = x @ params["w1"] + params["b1"][0]
    h = 0.5 * h * (1.0 + lax.erf(h / jnp.sqrt(jnp.float32(2.0))))
    y = (h @ params["w2"] + params["b2"][0]).reshape(B, h_in, h_in, ouc)

    pooled = jnp.zeros((B, n, n, ouc), jnp.float32)
    for oy in range(n):
        ys, ye = (oy * h_in) // n, -((-(oy + 1) * h_in) // n)
        for ox in range(n):
            xs, xe = (ox * h_in) // n, -((-(ox + 1) * h_in) // n)
            pooled = pooled.at[:, oy, ox, :].set(
                jnp.mean(y[:, ys:ye, xs:xe, :], axis=(1, 2)))

    pp = jnp.pad(pooled, ((0, 0), (1, 1), (1, 1), (0, 0)))
    conv = jnp.zeros_like(pooled)
    for dy in range(3):
        for dx in range(3):
            conv = conv + pp[:, dy:dy + n, dx:dx + n, :] * params["wc"][dy * 3 + dx]
    out = conv + params["bc"][0] + pooled
    return out.reshape(B, n * n, ouc)


# ----------------------------------------------------------------------------
def init_params(key, inc, ouc, num_mm_tokens):
    n_tokens = int(math.sqrt(num_mm_tokens))
    kw1, kb1, kw2, kb2, kwc, kbc = jax.random.split(key, 6)
    return {
        "w1": jax.random.normal(kw1, (inc, ouc), jnp.float32) / math.sqrt(inc),
        "b1": 0.02 * jax.random.normal(kb1, (1, ouc), jnp.float32),
        "w2": jax.random.normal(kw2, (ouc, ouc), jnp.float32) / math.sqrt(ouc),
        "b2": 0.02 * jax.random.normal(kb2, (1, ouc), jnp.float32),
        # depthwise conv weight, layout (9, C): row k = dy*3+dx equals
        # torch_conv.weight[:, 0, dy, dx]
        "wc": jax.random.normal(kwc, (9, ouc), jnp.float32) / 3.0,
        "bc": 0.02 * jax.random.normal(kbc, (1, ouc), jnp.float32),
        "n_tokens": n_tokens,
    }


if __name__ == "__main__":
    B = 2
    mm_hidden_size = 128     # inc  (multiple of 128 -> lane-dense)
    hidden_size = 128        # ouc  (multiple of 128 -> lane-dense)
    num_in_tokens = 64       # 8x8 vision-encoder grid
    num_mm_tokens = 16       # -> 4x4 after TokenDownLayer

    key = jax.random.PRNGKey(0)
    kx, kp = jax.random.split(key)
    x = jax.random.normal(kx, (B, num_in_tokens, mm_hidden_size), jnp.float32)
    params = init_params(kp, mm_hidden_size, hidden_size, num_mm_tokens)

    out = jax.block_until_ready(ldpnetv2_forward(params, x))
    assert out.shape == (B, num_mm_tokens, hidden_size), out.shape

    ref = ldpnetv2_reference(params, x)
    max_err = float(jnp.max(jnp.abs(out - ref)))
    # bf16 MXU operands (f32 accumulation) vs. the f32 reference -> small drift.
    if not bool(jnp.allclose(out, ref, atol=5e-2, rtol=5e-2)):
        raise AssertionError(f"kernel/reference mismatch, max abs err={max_err}")

    print("KERNEL_OK")
</pallas_src>

<mosaic_0001>
module attributes {stable_mosaic.version = 11 : i64} {
  func.func @_ldp_fused_kernel(%arg0: i32, %arg1: memref<64x128xbf16, #tpu.memory_space<vmem>>, %arg2: memref<128x128xbf16, #tpu.memory_space<vmem>>, %arg3: memref<1x128xf32, #tpu.memory_space<vmem>>, %arg4: memref<128x128xbf16, #tpu.memory_space<vmem>>, %arg5: memref<1x128xf32, #tpu.memory_space<vmem>>, %arg6: memref<16x64xf32, #tpu.memory_space<vmem>>, %arg7: memref<144x16xf32, #tpu.memory_space<vmem>>, %arg8: memref<9x128xf32, #tpu.memory_space<vmem>>, %arg9: memref<1x128xf32, #tpu.memory_space<vmem>>, %arg10: memref<16x128xf32, #tpu.memory_space<vmem>>) attributes {dimension_semantics = [#tpu.dimension_semantics<parallel>], iteration_bounds = array<i64: 2>, scalar_prefetch = 0 : i64, scratch_operands = 0 : i64, tpu.core_type = #tpu.core_type<tc>, window_params = [{transform_indices = @transform_0, window_bounds = array<i64: 64, 128>}, {pipeline_mode = #tpu.pipeline_mode<synchronous>, transform_indices = @transform_1, window_bounds = array<i64: 128, 128>}, {pipeline_mode = #tpu.pipeline_mode<synchronous>, transform_indices = @transform_2, window_bounds = array<i64: 1, 128>}, {pipeline_mode = #tpu.pipeline_mode<synchronous>, transform_indices = @transform_3, window_bounds = array<i64: 128, 128>}, {pipeline_mode = #tpu.pipeline_mode<synchronous>, transform_indices = @transform_4, window_bounds = array<i64: 1, 128>}, {pipeline_mode = #tpu.pipeline_mode<synchronous>, transform_indices = @transform_5, window_bounds = array<i64: 16, 64>}, {pipeline_mode = #tpu.pipeline_mode<synchronous>, transform_indices = @transform_6, window_bounds = array<i64: 144, 16>}, {pipeline_mode = #tpu.pipeline_mode<synchronous>, transform_indices = @transform_7, window_bounds = array<i64: 9, 128>}, {pipeline_mode = #tpu.pipeline_mode<synchronous>, transform_indices = @transform_8, window_bounds = array<i64: 1, 128>}, {transform_indices = @transform_9, window_bounds = array<i64: 16, 128>}]} {
    %c0 = arith.constant 0 : index
    %c0_0 = arith.constant 0 : index
    %0 = vector.load %arg1[%c0, %c0_0] : memref<64x128xbf16, #tpu.memory_space<vmem>>, vector<64x128xbf16>
    %c0_1 = arith.constant 0 : index
    %c0_2 = arith.constant 0 : index
    %1 = vector.load %arg2[%c0_1, %c0_2] : memref<128x128xbf16, #tpu.memory_space<vmem>>, vector<128x128xbf16>
    %cst = arith.constant dense<0.000000e+00> : vector<64x128xf32>
    %2 = tpu.matmul %0, %1, %cst {dimension_numbers = #tpu.dot_dimension_numbers<[1], [0], [0], [1], [0, 0, 1, 1], [], []>} : vector<64x128xbf16>, vector<128x128xbf16>, vector<64x128xf32> -> vector<64x128xf32>
    %c0_3 = arith.constant 0 : index
    %c0_4 = arith.constant 0 : index
    %3 = vector.load %arg3[%c0_3, %c0_4] : memref<1x128xf32, #tpu.memory_space<vmem>>, vector<1x128xf32>
    %4 = vector.broadcast %3 : vector<1x128xf32> to vector<64x128xf32>
    %5 = arith.addf %2, %4 : vector<64x128xf32>
    %cst_5 = arith.constant 5.000000e-01 : f32
    %6 = vector.broadcast %cst_5 : f32 to vector<64x128xf32>
    %7 = arith.mulf %6, %5 : vector<64x128xf32>
    %cst_6 = arith.constant 0.707106769 : f32
    %8 = vector.broadcast %cst_6 : f32 to vector<64x128xf32>
    %9 = arith.mulf %5, %8 : vector<64x128xf32>
    %10 = math.erf %9 : vector<64x128xf32>
    %cst_7 = arith.constant 1.000000e+00 : f32
    %11 = vector.broadcast %cst_7 : f32 to vector<64x128xf32>
    %12 = arith.addf %11, %10 : vector<64x128xf32>
    %13 = arith.mulf %7, %12 : vector<64x128xf32>
    %c0_8 = arith.constant 0 : index
    %c0_9 = arith.constant 0 : index
    %14 = vector.load %arg6[%c0_8, %c0_9] : memref<16x64xf32, #tpu.memory_space<vmem>>, vector<16x64xf32>
    %cst_10 = arith.constant dense<0.000000e+00> : vector<16x128xf32>
    %15 = tpu.matmul %14, %13, %cst_10 {dimension_numbers = #tpu.dot_dimension_numbers<[1], [0], [0], [1], [0, 0, 1, 1], [], []>} : vector<16x64xf32>, vector<64x128xf32>, vector<16x128xf32> -> vector<16x128xf32>
    %16 = arith.truncf %15 : vector<16x128xf32> to vector<16x128xbf16>
    %c0_11 = arith.constant 0 : index
    %c0_12 = arith.constant 0 : index
    %17 = vector.load %arg4[%c0_11, %c0_12] : memref<128x128xbf16, #tpu.memory_space<vmem>>, vector<128x128xbf16>
    %cst_13 = arith.constant dense<0.000000e+00> : vector<16x128xf32>
    %18 = tpu.matmul %16, %17, %cst_13 {dimension_numbers = #tpu.dot_dimension_numbers<[1], [0], [0], [1], [0, 0, 1, 1], [], []>} : vector<16x128xbf16>, vector<128x128xbf16>, vector<16x128xf32> -> vector<16x128xf32>
    %c0_14 = arith.constant 0 : index
    %c0_15 = arith.constant 0 : index
    %19 = vector.load %arg5[%c0_14, %c0_15] : memref<1x128xf32, #tpu.memory_space<vmem>>, vector<1x128xf32>
    %20 = vector.broadcast %19 : vector<1x128xf32> to vector<16x128xf32>
    %21 = arith.addf %18, %20 : vector<16x128xf32>
    %c0_16 = arith.constant 0 : index
    %c0_17 = arith.constant 0 : index
    %22 = vector.load %arg7[%c0_16, %c0_17] : memref<144x16xf32, #tpu.memory_space<vmem>>, vector<144x16xf32>
    %cst_18 = arith.constant dense<0.000000e+00> : vector<144x128xf32>
    %23 = tpu.matmul %22, %21, %cst_18 {dimension_numbers = #tpu.dot_dimension_numbers<[1], [0], [0], [1], [0, 0, 1, 1], [], []>} : vector<144x16xf32>, vector<16x128xf32>, vector<144x128xf32> -> vector<144x128xf32>
    %c0_19 = arith.constant 0 : index
    %c0_20 = arith.constant 0 : index
    %24 = vector.load %arg8[%c0_19, %c0_20] : memref<9x128xf32, #tpu.memory_space<vmem>>, vector<9x128xf32>
    %c0_21 = arith.constant 0 : index
    %c0_22 = arith.constant 0 : index
    %25 = vector.load %arg9[%c0_21, %c0_22] : memref<1x128xf32, #tpu.memory_space<vmem>>, vector<1x128xf32>
    %26 = vector.broadcast %25 : vector<1x128xf32> to vector<16x128xf32>
    %27 = arith.addf %21, %26 : vector<16x128xf32>
    %28 = vector.extract_strided_slice %23 {offsets = [0, 0], sizes = [16, 128], strides = [1, 1]} : vector<144x128xf32> to vector<16x128xf32>
    %29 = vector.extract_strided_slice %24 {offsets = [0, 0], sizes = [1, 128], strides = [1, 1]} : vector<9x128xf32> to vector<1x128xf32>
    %30 = vector.broadcast %29 : vector<1x128xf32> to vector<16x128xf32>
    %31 = arith.mulf %28, %30 : vector<16x128xf32>
    %32 = arith.addf %27, %31 : vector<16x128xf32>
    %33 = vector.extract_strided_slice %23 {offsets = [16, 0], sizes = [16, 128], strides = [1, 1]} : vector<144x128xf32> to vector<16x128xf32>
    %34 = vector.extract_strided_slice %24 {offsets = [1, 0], sizes = [1, 128], strides = [1, 1]} : vector<9x128xf32> to vector<1x128xf32>
    %35 = vector.broadcast %34 : vector<1x128xf32> to vector<16x128xf32>
    %36 = arith.mulf %33, %35 : vector<16x128xf32>
    %37 = arith.addf %32, %36 : vector<16x128xf32>
    %38 = vector.extract_strided_slice %23 {offsets = [32, 0], sizes = [16, 128], strides = [1, 1]} : vector<144x128xf32> to vector<16x128xf32>
    %39 = vector.extract_strided_slice %24 {offsets = [2, 0], sizes = [1, 128], strides = [1, 1]} : vector<9x128xf32> to vector<1x128xf32>
    %40 = vector.broadcast %39 : vector<1x128xf32> to vector<16x128xf32>
    %41 = arith.mulf %38, %40 : vector<16x128xf32>
    %42 = arith.addf %37, %41 : vector<16x128xf32>
    %43 = vector.extract_strided_slice %23 {offsets = [48, 0], sizes = [16, 128], strides = [1, 1]} : vector<144x128xf32> to vector<16x128xf32>
    %44 = vector.extract_strided_slice %24 {offsets = [3, 0], sizes = [1, 128], strides = [1, 1]} : vector<9x128xf32> to vector<1x128xf32>
    %45 = vector.broadcast %44 : vector<1x128xf32> to vector<16x128xf32>
    %46 = arith.mulf %43, %45 : vector<16x128xf32>
    %47 = arith.addf %42, %46 : vector<16x128xf32>
    %48 = vector.extract_strided_slice %23 {offsets = [64, 0], sizes = [16, 128], strides = [1, 1]} : vector<144x128xf32> to vector<16x128xf32>
    %49 = vector.extract_strided_slice %24 {offsets = [4, 0], sizes = [1, 128], strides = [1, 1]} : vector<9x128xf32> to vector<1x128xf32>
    %50 = vector.broadcast %49 : vector<1x128xf32> to vector<16x128xf32>
    %51 = arith.mulf %48, %50 : vector<16x128xf32>
    %52 = arith.addf %47, %51 : vector<16x128xf32>
    %53 = vector.extract_strided_slice %23 {offsets = [80, 0], sizes = [16, 128], strides = [1, 1]} : vector<144x128xf32> to vector<16x128xf32>
    %54 = vector.extract_strided_slice %24 {offsets = [5, 0], sizes = [1, 128], strides = [1, 1]} : vector<9x128xf32> to vector<1x128xf32>
    %55 = vector.broadcast %54 : vector<1x128xf32> to vector<16x128xf32>
    %56 = arith.mulf %53, %55 : vector<16x128xf32>
    %57 = arith.addf %52, %56 : vector<16x128xf32>
    %58 = vector.extract_strided_slice %23 {offsets = [96, 0], sizes = [16, 128], strides = [1, 1]} : vector<144x128xf32> to vector<16x128xf32>
    %59 = vector.extract_strided_slice %24 {offsets = [6, 0], sizes = [1, 128], strides = [1, 1]} : vector<9x128xf32> to vector<1x128xf32>
    %60 = vector.broadcast %59 : vector<1x128xf32> to vector<16x128xf32>
    %61 = arith.mulf %58, %60 : vector<16x128xf32>
    %62 = arith.addf %57, %61 : vector<16x128xf32>
    %63 = vector.extract_strided_slice %23 {offsets = [112, 0], sizes = [16, 128], strides = [1, 1]} : vector<144x128xf32> to vector<16x128xf32>
    %64 = vector.extract_strided_slice %24 {offsets = [7, 0], sizes = [1, 128], strides = [1, 1]} : vector<9x128xf32> to vector<1x128xf32>
    %65 = vector.broadcast %64 : vector<1x128xf32> to vector<16x128xf32>
    %66 = arith.mulf %63, %65 : vector<16x128xf32>
    %67 = arith.addf %62, %66 : vector<16x128xf32>
    %68 = vector.extract_strided_slice %23 {offsets = [128, 0], sizes = [16, 128], strides = [1, 1]} : vector<144x128xf32> to vector<16x128xf32>
    %69 = vector.extract_strided_slice %24 {offsets = [8, 0], sizes = [1, 128], strides = [1, 1]} : vector<9x128xf32> to vector<1x128xf32>
    %70 = vector.broadcast %69 : vector<1x128xf32> to vector<16x128xf32>
    %71 = arith.mulf %68, %70 : vector<16x128xf32>
    %72 = arith.addf %67, %71 : vector<16x128xf32>
    %c0_23 = arith.constant 0 : index
    %c0_24 = arith.constant 0 : index
    %73 = vector.load %arg10[%c0_23, %c0_24] : memref<16x128xf32, #tpu.memory_space<vmem>>, vector<16x128xf32>
    tpu.vector_store %arg10[%c0_23, %c0_24], %72 {strides = array<i32>} : memref<16x128xf32, #tpu.memory_space<vmem>>, vector<16x128xf32>,
    return
  }
  func.func @transform_0(%arg0: i32) -> (i32, i32) {
    %c0_i32 = arith.constant 0 : i32
    %c0_i32_0 = arith.constant 0 : i32
    return %arg0, %c0_i32 : i32, i32
  }
  func.func @transform_1(%arg0: i32) -> (i32, i32) {
    %c0_i32 = arith.constant 0 : i32
    %c0_i32_0 = arith.constant 0 : i32
    %c0_i32_1 = arith.constant 0 : i32
    return %c0_i32, %c0_i32_0 : i32, i32
  }
  func.func @transform_2(%arg0: i32) -> (i32, i32) {
    %c0_i32 = arith.constant 0 : i32
    %c0_i32_0 = arith.constant 0 : i32
    %c0_i32_1 = arith.constant 0 : i32
    return %c0_i32, %c0_i32_0 : i32, i32
  }
  func.func @transform_3(%arg0: i32) -> (i32, i32) {
    %c0_i32 = arith.constant 0 : i32
    %c0_i32_0 = arith.constant 0 : i32
    %c0_i32_1 = arith.constant 0 : i32
    return %c0_i32, %c0_i32_0 : i32, i32
  }
  func.func @transform_4(%arg0: i32) -> (i32, i32) {
    %c0_i32 = arith.constant 0 : i32
    %c0_i32_0 = arith.constant 0 : i32
    %c0_i32_1 = arith.constant 0 : i32
    return %c0_i32, %c0_i32_0 : i32, i32
  }
  func.func @transform_5(%arg0: i32) -> (i32, i32) {
    %c0_i32 = arith.constant 0 : i32
    %c0_i32_0 = arith.constant 0 : i32
    %c0_i32_1 = arith.constant 0 : i32
    return %c0_i32, %c0_i32_0 : i32, i32
  }
  func.func @transform_6(%arg0: i32) -> (i32, i32) {
    %c0_i32 = arith.constant 0 : i32
    %c0_i32_0 = arith.constant 0 : i32
    %c0_i32_1 = arith.constant 0 : i32
    return %c0_i32, %c0_i32_0 : i32, i32
  }
  func.func @transform_7(%arg0: i32) -> (i32, i32) {
    %c0_i32 = arith.constant 0 : i32
    %c0_i32_0 = arith.constant 0 : i32
    %c0_i32_1 = arith.constant 0 : i32
    return %c0_i32, %c0_i32_0 : i32, i32
  }
  func.func @transform_8(%arg0: i32) -> (i32, i32) {
    %c0_i32 = arith.constant 0 : i32
    %c0_i32_0 = arith.constant 0 : i32
    %c0_i32_1 = arith.constant 0 : i32
    return %c0_i32, %c0_i32_0 : i32, i32
  }
  func.func @transform_9(%arg0: i32) -> (i32, i32) {
    %c0_i32 = arith.constant 0 : i32
    %c0_i32_0 = arith.constant 0 : i32
    return %arg0, %c0_i32 : i32, i32
  }
}

</mosaic_0001>

<llo_original>
// kernel: tpu_custom_call.1
$region0: #{tpu_custom_call.1}
  #allocation0 [shape = 'u32[]', space=smem, size = 0x4, offset = 0x4, fixed_abs, tag = 'smem constant byte address 0x4 - core index']
  #allocation1 [shape = 'u32[144,128]{1,0:T(1,128)}', space=vmem, size = 0x12000, scoped, tag = 'internal scratch']
  %s0 = inlined_call_operand.vmem [shape: bf16[128,128], index: 0, kind: input, shape index: {}]
  %s1 = inlined_call_operand.vmem [shape: bf16[128,128], index: 1, kind: input, shape index: {}]
  %s2 = inlined_call_operand.vmem [shape: f32[1,128], index: 2, kind: input, shape index: {}]
  %s3 = inlined_call_operand.hbm [shape: bf16[128,128], index: 3, kind: input, shape index: {}]
  %s4 = inlined_call_operand.vmem [shape: f32[1,128], index: 4, kind: input, shape index: {}]
  %s5 = inlined_call_operand.vmem [shape: f32[16,64], index: 5, kind: input, shape index: {}]
  %s6 = inlined_call_operand.vmem [shape: f32[144,16], index: 6, kind: input, shape index: {}]
  %s7 = inlined_call_operand.vmem [shape: f32[9,128], index: 7, kind: input, shape index: {}]
  %s8 = inlined_call_operand.vmem [shape: f32[1,128], index: 8, kind: input, shape index: {}]
  %s9 = inlined_call_operand.hbm [shape: f32[32,128], index: 9, kind: output, shape index: {}]
  %s10 = sld [smem:[#allocation0]]
  $region73: #{tpu_custom_call.1} parent=0
    _
  %s12 = ssub.s32 1, %s10
  %s13 = scalar_select 0, %s12, %s10
  $region1: #{tpu_custom_call.1} parent=0
    #allocation2 [shape = 'u8[32768]{0}', space=vmem, size = 0x8000, scoped, tag = 'input window, operand 3, single buffered']
    #allocation3 [shape = 's32[2]{0}', space=sflag, size = 0x8, scoped, tag = 'scoped memory for tpu_custom_call.1']
    #allocation4 [shape = 's32[2]{0}', space=sflag, size = 0x8, scoped, tag = 'scoped memory for tpu_custom_call.1']
    #allocation5 [shape = 'u8[16384]{0}', space=vmem, size = 0x4000, scoped, tag = 'output window, operand 0']
    %14 = vsyncpa [#allocation3], 0
    %15 = vsyncpa [#allocation4], 0
    %s16 = scalar_lea.sflag [#allocation4], 1
    %17 = vsyncpa %s16, 0
    loop: start=0, step=1, limit=4
    $region2: #{tpu_custom_call.1} parent=1 // loop_pre_header
      _
    $region3: #{tpu_custom_call.1} parent=1 // loop_header
      %s19 = sphi 0, %s23
      %p20 = scmp.ge.s32.totalorder %s19, 4
      %s29 = sphi 0, %s31
      %s32 = sphi 0, %s29
      %s33 = sphi 0, %s32
      %s49 = sphi 0, %s33
      %s53 = sphi 0, %s53
      %s55 = sphi 0, %s53
      %s56 = sphi 0, %s55
      %s70 = sphi 0, %s56
      %s74 = sphi 0, %s74
      %s76 = sphi 0, %s74
      %s77 = sphi 0, %s76
      %s91 = sphi 0, %s77
      %s95 = sphi 0, %s95
      %s97 = sphi 0, %s95
      %s98 = sphi 0, %s97
      %s112 = sphi 0, %s98
      %s116 = sphi 0, %s116
      %s118 = sphi 0, %s116
      %s119 = sphi 0, %s118
      %s133 = sphi 0, %s119
      %s137 = sphi 0, %s137
      %s139 = sphi 0, %s137
      %s140 = sphi 0, %s139
      %s154 = sphi 0, %s140
      %s158 = sphi 0, %s158
      %s160 = sphi 0, %s158
      %s161 = sphi 0, %s160
      %s175 = sphi 0, %s161
      %s179 = sphi 0, %s179
      %s181 = sphi 0, %s179
      %s182 = sphi 0, %s181
      %s196 = sphi 0, %s182
      %s200 = sphi 0, %s200
      %s202 = sphi 0, %s200
      %s203 = sphi 0, %s202
      %s217 = sphi 0, %s203
      %s223 = sphi 0, %s225
      %s226 = sphi 0, %s223
      %s227 = sphi 0, %s226
      %s243 = sphi 0, %s227
    $region4: #{tpu_custom_call.1} parent=1 // loop_header_branch
      %22 = sbr.rel (%p20) target = $region8
    $region5: #{tpu_custom_call.1} parent=1 // loop_body
      %s24 = ssub.s32 %s19, 1
      %s25 = ssub.s32 %s19, 2
      %s26 = sadd.s32 %s19, 1
      %s27 = ssub.s32 %s19, %s26
      %p28 = scmp.eq.s32.totalorder %s27, 0
      %s30 = sadd.s32 %s29, 1
      %s31 = scalar_select %p28, %s29, %s30
      %p34 = pneg %p28
      %p35 = scmp.eq.s32.totalorder %s19, 1
      %p36 = por %p34, %p35
      %p37 = scmp.ne.s32.totalorder %s29, %s32
      %p38 = scmp.eq.s32.totalorder %s19, 0
      %p39 = por %p37, %p38
      %p40 = scmp.ne.s32.totalorder %s29, %s32
      %p41 = scmp.eq.s32.totalorder %s24, 1
      %p42 = por %p40, %p41
      %p43 = scmp.ne.s32.totalorder %s32, %s33
      %p44 = scmp.eq.s32.totalorder %s24, 0
      %p45 = por %p43, %p44
      %p46 = scmp.ne.s32.totalorder %s32, %s33
      %p47 = scmp.eq.s32.totalorder %s25, 1
      %p48 = por %p46, %p47
      %p50 = scmp.ne.s32.totalorder %s33, %s49
      %p51 = scmp.eq.s32.totalorder %s25, 0
      %p52 = por %p50, %p51
      %s54 = sadd.s32 %s53, 1
      %p57 = scmp.eq.s32.totalorder %s19, 1
      %p58 = scmp.ne.s32.totalorder %s53, %s55
      %p59 = scmp.eq.s32.totalorder %s19, 0
      %p60 = por %p58, %p59
      %p61 = scmp.ne.s32.totalorder %s53, %s55
      %p62 = scmp.eq.s32.totalorder %s24, 1
      %p63 = por %p61, %p62
      %p64 = scmp.ne.s32.totalorder %s55, %s56
      %p65 = scmp.eq.s32.totalorder %s24, 0
      %p66 = por %p64, %p65
      %p67 = scmp.ne.s32.totalorder %s55, %s56
      %p68 = scmp.eq.s32.totalorder %s25, 1
      %p69 = por %p67, %p68
      %p71 = scmp.ne.s32.totalorder %s56, %s70
      %p72 = scmp.eq.s32.totalorder %s25, 0
      %p73 = por %p71, %p72
      %s75 = sadd.s32 %s74, 1
      %p78 = scmp.eq.s32.totalorder %s19, 1
      %p79 = scmp.ne.s32.totalorder %s74, %s76
      %p80 = scmp.eq.s32.totalorder %s19, 0
      %p81 = por %p79, %p80
      %p82 = scmp.ne.s32.totalorder %s74, %s76
      %p83 = scmp.eq.s32.totalorder %s24, 1
      %p84 = por %p82, %p83
      %p85 = scmp.ne.s32.totalorder %s76, %s77
      %p86 = scmp.eq.s32.totalorder %s24, 0
      %p87 = por %p85, %p86
      %p88 = scmp.ne.s32.totalorder %s76, %s77
      %p89 = scmp.eq.s32.totalorder %s25, 1
      %p90 = por %p88, %p89
      %p92 = scmp.ne.s32.totalorder %s77, %s91
      %p93 = scmp.eq.s32.totalorder %s25, 0
      %p94 = por %p92, %p93
      %s96 = sadd.s32 %s95, 1
      %p99 = scmp.eq.s32.totalorder %s19, 1
      %p100 = scmp.ne.s32.totalorder %s95, %s97
      %p101 = scmp.eq.s32.totalorder %s19, 0
      %p102 = por %p100, %p101
      %p103 = scmp.ne.s32.totalorder %s95, %s97
      %p104 = scmp.eq.s32.totalorder %s24, 1
      %p105 = por %p103, %p104
      %p106 = scmp.ne.s32.totalorder %s97, %s98
      %p107 = scmp.eq.s32.totalorder %s24, 0
      %p108 = por %p106, %p107
      %p109 = scmp.ne.s32.totalorder %s97, %s98
      %p110 = scmp.eq.s32.totalorder %s25, 1
      %p111 = por %p109, %p110
      %p113 = scmp.ne.s32.totalorder %s98, %s112
      %p114 = scmp.eq.s32.totalorder %s25, 0
      %p115 = por %p113, %p114
      %s117 = sadd.s32 %s116, 1
      %p120 = scmp.eq.s32.totalorder %s19, 1
      %p121 = scmp.ne.s32.totalorder %s116, %s118
      %p122 = scmp.eq.s32.totalorder %s19, 0
      %p123 = por %p121, %p122
      %p124 = scmp.ne.s32.totalorder %s116, %s118
      %p125 = scmp.eq.s32.totalorder %s24, 1
      %p126 = por %p124, %p125
      %p127 = scmp.ne.s32.totalorder %s118, %s119
      %p128 = scmp.eq.s32.totalorder %s24, 0
      %p129 = por %p127, %p128
      %p130 = scmp.ne.s32.totalorder %s118, %s119
      %p131 = scmp.eq.s32.totalorder %s25, 1
      %p132 = por %p130, %p131
      %p134 = scmp.ne.s32.totalorder %s119, %s133
      %p135 = scmp.eq.s32.totalorder %s25, 0
      %p136 = por %p134, %p135
      %s138 = sadd.s32 %s137, 1
      %p141 = scmp.eq.s32.totalorder %s19, 1
      %p142 = scmp.ne.s32.totalorder %s137, %s139
      %p143 = scmp.eq.s32.totalorder %s19, 0
      %p144 = por %p142, %p143
      %p145 = scmp.ne.s32.totalorder %s137, %s139
      %p146 = scmp.eq.s32.totalorder %s24, 1
      %p147 = por %p145, %p146
      %p148 = scmp.ne.s32.totalorder %s139, %s140
      %p149 = scmp.eq.s32.totalorder %s24, 0
      %p150 = por %p148, %p149
      %p151 = scmp.ne.s32.totalorder %s139, %s140
      %p152 = scmp.eq.s32.totalorder %s25, 1
      %p153 = por %p151, %p152
      %p155 = scmp.ne.s32.totalorder %s140, %s154
      %p156 = scmp.eq.s32.totalorder %s25, 0
      %p157 = por %p155, %p156
      %s159 = sadd.s32 %s158, 1
      %p162 = scmp.eq.s32.totalorder %s19, 1
      %p163 = scmp.ne.s32.totalorder %s158, %s160
      %p164 = scmp.eq.s32.totalorder %s19, 0
      %p165 = por %p163, %p164
      %p166 = scmp.ne.s32.totalorder %s158, %s160
      %p167 = scmp.eq.s32.totalorder %s24, 1
      %p168 = por %p166, %p167
      %p169 = scmp.ne.s32.totalorder %s160, %s161
      %p170 = scmp.eq.s32.totalorder %s24, 0
      %p171 = por %p169, %p170
      %p172 = scmp.ne.s32.totalorder %s160, %s161
      %p173 = scmp.eq.s32.totalorder %s25, 1
      %p174 = por %p172, %p173
      %p176 = scmp.ne.s32.totalorder %s161, %s175
      %p177 = scmp.eq.s32.totalorder %s25, 0
      %p178 = por %p176, %p177
      %s180 = sadd.s32 %s179, 1
      %p183 = scmp.eq.s32.totalorder %s19, 1
      %p184 = scmp.ne.s32.totalorder %s179, %s181
      %p185 = scmp.eq.s32.totalorder %s19, 0
      %p186 = por %p184, %p185
      %p187 = scmp.ne.s32.totalorder %s179, %s181
      %p188 = scmp.eq.s32.totalorder %s24, 1
      %p189 = por %p187, %p188
      %p190 = scmp.ne.s32.totalorder %s181, %s182
      %p191 = scmp.eq.s32.totalorder %s24, 0
      %p192 = por %p190, %p191
      %p193 = scmp.ne.s32.totalorder %s181, %s182
      %p194 = scmp.eq.s32.totalorder %s25, 1
      %p195 = por %p193, %p194
      %p197 = scmp.ne.s32.totalorder %s182, %s196
      %p198 = scmp.eq.s32.totalorder %s25, 0
      %p199 = por %p197, %p198
      %s201 = sadd.s32 %s200, 1
      %p204 = scmp.eq.s32.totalorder %s19, 1
      %p205 = scmp.ne.s32.totalorder %s200, %s202
      %p206 = scmp.eq.s32.totalorder %s19, 0
      %p207 = por %p205, %p206
      %p208 = scmp.ne.s32.totalorder %s200, %s202
      %p209 = scmp.eq.s32.totalorder %s24, 1
      %p210 = por %p208, %p209
      %p211 = scmp.ne.s32.totalorder %s202, %s203
      %p212 = scmp.eq.s32.totalorder %s24, 0
      %p213 = por %p211, %p212
      %p214 = scmp.ne.s32.totalorder %s202, %s203
      %p215 = scmp.eq.s32.totalorder %s25, 1
      %p216 = por %p214, %p215
      %p218 = scmp.ne.s32.totalorder %s203, %s217
      %p219 = scmp.eq.s32.totalorder %s25, 0
      %p220 = por %p218, %p219
      %s221 = ssub.s32 %s19, %s26
      %p222 = scmp.eq.s32.totalorder %s221, 0
      %s224 = sadd.s32 %s223, 1
      %s225 = scalar_select %p222, %s223, %s224
      %p228 = pneg %p222
      %p229 = scmp.eq.s32.totalorder %s19, 1
      %p230 = por %p228, %p229
      %p231 = scmp.ne.s32.totalorder %s223, %s226
      %p232 = scmp.eq.s32.totalorder %s19, 0
      %p233 = por %p231, %p232
      %p234 = scmp.ne.s32.totalorder %s223, %s226
      %p235 = scmp.eq.s32.totalorder %s24, 1
      %p236 = por %p234, %p235
      %p237 = scmp.ne.s32.totalorder %s226, %s227
      %p238 = scmp.eq.s32.totalorder %s24, 0
      %p239 = por %p237, %p238
      %p240 = scmp.ne.s32.totalorder %s226, %s227
      %p241 = scmp.eq.s32.totalorder %s25, 1
      %p242 = por %p240, %p241
      %p244 = scmp.ne.s32.totalorder %s227, %s243
      %p245 = scmp.eq.s32.totalorder %s25, 0
      %p246 = por %p244, %p245
      %p247 = scmp.le.s32.totalorder 1, %s19
      %p248 = scmp.lt.s32.totalorder %s19, 3
      %p249 = pnand %p247, %p248
      %p250 = pneg %p249
      // Predicated region
      $region9: #{tpu_custom_call.1} parent=5 // pred_check
        _
      $region10: #{tpu_custom_call.1} parent=5 // pred_check_branch
        %252 = sbr.rel (%p249) target = $region12
      $region11: #{tpu_custom_call.1} parent=5 // pred_region
        %s253 = ssub.s32 %s19, 1
        // Predicated region
        $region13: #{tpu_custom_call.1} parent=11 // pred_check
          %p254 = pneg %p66
        $region14: #{tpu_custom_call.1} parent=11 // pred_check_branch
          %256 = sbr.rel (%p254) target = $region16
        $region15: #{tpu_custom_call.1} parent=11 // pred_region
          _
        $region16: #{tpu_custom_call.1} parent=11 // pred_fallthru
          _
        // Predicated region
        $region17: #{tpu_custom_call.1} parent=11 // pred_check
          %p257 = pneg %p87
        $region18: #{tpu_custom_call.1} parent=11 // pred_check_branch
          %259 = sbr.rel (%p257) target = $region20
        $region19: #{tpu_custom_call.1} parent=11 // pred_region
          _
        $region20: #{tpu_custom_call.1} parent=11 // pred_fallthru
          _
        // Predicated region
        $region21: #{tpu_custom_call.1} parent=11 // pred_check
          %p260 = pneg %p108
        $region22: #{tpu_custom_call.1} parent=11 // pred_check_branch
          %262 = sbr.rel (%p260) target = $region24
        $region23: #{tpu_custom_call.1} parent=11 // pred_region
          %s264 = ssub.s32 1024, 1024
          %265 = vsyncadd [#allocation3], %s264
          %s266 = sshll.u32 [#allocation2], 4
          %s267 = int_to_ptr.vmem [resolvable:$true] %s266
          %272 = dma.hbm_to_vmem [thread:$0]  %s3, 1024, %s267, [#allocation3], 64, 64, 4
        $region24: #{tpu_custom_call.1} parent=11 // pred_fallthru
          _
        // Predicated region
        $region25: #{tpu_custom_call.1} parent=11 // pred_check
          %p273 = pneg %p129
        $region26: #{tpu_custom_call.1} parent=11 // pred_check_branch
          %275 = sbr.rel (%p273) target = $region28
        $region27: #{tpu_custom_call.1} parent=11 // pred_region
          _
        $region28: #{tpu_custom_call.1} parent=11 // pred_fallthru
          _
        // Predicated region
        $region29: #{tpu_custom_call.1} parent=11 // pred_check
          %p276 = pneg %p150
        $region30: #{tpu_custom_call.1} parent=11 // pred_check_branch
          %278 = sbr.rel (%p276) target = $region32
        $region31: #{tpu_custom_call.1} parent=11 // pred_region
          _
        $region32: #{tpu_custom_call.1} parent=11 // pred_fallthru
          _
        // Predicated region
        $region33: #{tpu_custom_call.1} parent=11 // pred_check
          %p279 = pneg %p171
        $region34: #{tpu_custom_call.1} parent=11 // pred_check_branch
          %281 = sbr.rel (%p279) target = $region36
        $region35: #{tpu_custom_call.1} parent=11 // pred_region
          _
        $region36: #{tpu_custom_call.1} parent=11 // pred_fallthru
          _
        // Predicated region
        $region37: #{tpu_custom_call.1} parent=11 // pred_check
          %p282 = pneg %p192
        $region38: #{tpu_custom_call.1} parent=11 // pred_check_branch
          %284 = sbr.rel (%p282) target = $region40
        $region39: #{tpu_custom_call.1} parent=11 // pred_region
          _
        $region40: #{tpu_custom_call.1} parent=11 // pred_fallthru
          _
        // Predicated region
        $region41: #{tpu_custom_call.1} parent=11 // pred_check
          %p285 = pneg %p213
        $region42: #{tpu_custom_call.1} parent=11 // pred_check_branch
          %287 = sbr.rel (%p285) target = $region44
        $region43: #{tpu_custom_call.1} parent=11 // pred_region
          _
        $region44: #{tpu_custom_call.1} parent=11 // pred_fallthru
          _
      $region12: #{tpu_custom_call.1} parent=5 // pred_fallthru
        _
      %p288 = scmp.lt.s32.totalorder %s19, 2
      // Predicated region
      $region45: #{tpu_custom_call.1} parent=5 // pred_check
        %p289 = pneg %p288
      $region46: #{tpu_custom_call.1} parent=5 // pred_check_branch
        %291 = sbr.rel (%p289) target = $region48
      $region47: #{tpu_custom_call.1} parent=5 // pred_region
        // Predicated region
        $region49: #{tpu_custom_call.1} parent=47 // pred_check
          %p292 = pneg %p39
        $region50: #{tpu_custom_call.1} parent=47 // pred_check_branch
          %294 = sbr.rel (%p292) target = $region52
        $region51: #{tpu_custom_call.1} parent=47 // pred_region
          %s295 = smul.u32 8, %s19
          %p296 = scmp.lt.s32.totalorder %s295, 15
          %s297 = scalar_select %p296, %s295, 15
          %s298 = smul.addr %s297, 4
          %s299 = scalar_lea.vmem %s0, %s298
          %s300 = smul.u32 8, %s19
        $region52: #{tpu_custom_call.1} parent=47 // pred_fallthru
          _
      $region48: #{tpu_custom_call.1} parent=5 // pred_fallthru
        _
      %p301 = scmp.le.s32.totalorder 1, %s19
      %p302 = scmp.lt.s32.totalorder %s19, 3
      %p303 = pnand %p301, %p302
      %p304 = pneg %p303
      // Predicated region
      $region53: #{tpu_custom_call.1} parent=5 // pred_check
        _
      $region54: #{tpu_custom_call.1} parent=5 // pred_check_branch
        %306 = sbr.rel (%p303) target = $region56
      $region55: #{tpu_custom_call.1} parent=5 // pred_region
        %s307 = ssub.s32 %s19, 1
        // Predicated region
        $region57: #{tpu_custom_call.1} parent=55 // pred_check
          %p308 = pneg %p108
        $region58: #{tpu_custom_call.1} parent=55 // pred_check_branch
          %310 = sbr.rel (%p308) target = $region60
        $region59: #{tpu_custom_call.1} parent=55 // pred_region
          %311 = dma.done [#allocation3], 1024
        $region60: #{tpu_custom_call.1} parent=55 // pred_fallthru
          _
        %s312 = smul.u32 8, %s24
        %p313 = scmp.lt.s32.totalorder %s312, 15
        %s314 = scalar_select %p313, %s312, 15
        %s315 = smul.addr %s314, 4
        %s316 = scalar_lea.vmem %s0, %s315
        %p317 = pneg %p45
        %p318 = pneg %p42
        %p319 = pneg %p66
        %p320 = pneg %p63
        %p321 = pneg %p87
        %p322 = pneg %p84
        %p323 = pneg %p108
        %p324 = pneg %p105
        %p325 = pneg %p129
        %p326 = pneg %p126
        %p327 = pneg %p150
        %p328 = pneg %p147
        %p329 = pneg %p171
        %p330 = pneg %p168
        %p331 = pneg %p192
        %p332 = pneg %p189
        %p333 = pneg %p213
        %p334 = pneg %p210
        %p335 = pneg %p239
        %p336 = pneg %p236
        %s337 = sand.u32 %s226, 1
        %s338 = scalar_lea.sflag [#allocation4], %s337
        %s339 = sand.u32 %s226, 1
        %s340 = smul.addr %s339, 16
        %s341 = scalar_lea.vmem [#allocation5], %s340
        %s342 = smul.u32 8, %s24
        %p343 = scmp.lt.s32.totalorder %s342, 15
        %s344 = scalar_select %p343, %s342, 15
        %s345 = smul.addr %s344, 4
        %s346 = scalar_lea.vmem %s0, %s345
        %s347 = smul.u32 8, %s24
        %s348 = smul.u32 2, %s24
        %v350 = vld [vmem:[%s346] sm:$0xf]
        %v351 = vld [vmem:[%s346 + $0x4] sm:$0xf]
        %v352 = vld [vmem:[%s346 + $0x8] sm:$0xf]
        %v353 = vld [vmem:[%s346 + $0xc] sm:$0xf]
        %v354 = vld [vmem:[%s346 + $0x10] sm:$0xf]
        %v355 = vld [vmem:[%s346 + $0x14] sm:$0xf]
        %v356 = vld [vmem:[%s346 + $0x18] sm:$0xf]
        %v357 = vld [vmem:[%s346 + $0x1c] sm:$0xf]
        %v358 = vld [vmem:[%s1] sm:$0xf]
        %v359 = vld [vmem:[%s1 + $0x4] sm:$0xf]
        %v360 = vld [vmem:[%s1 + $0x8] sm:$0xf]
        %v361 = vld [vmem:[%s1 + $0xc] sm:$0xf]
        %v362 = vld [vmem:[%s1 + $0x10] sm:$0xf]
        %v363 = vld [vmem:[%s1 + $0x14] sm:$0xf]
        %v364 = vld [vmem:[%s1 + $0x18] sm:$0xf]
        %v365 = vld [vmem:[%s1 + $0x1c] sm:$0xf]
        %v366 = vld [vmem:[%s1 + $0x20] sm:$0xf]
        %v367 = vld [vmem:[%s1 + $0x24] sm:$0xf]
        %v368 = vld [vmem:[%s1 + $0x28] sm:$0xf]
        %v369 = vld [vmem:[%s1 + $0x2c] sm:$0xf]
        %v370 = vld [vmem:[%s1 + $0x30] sm:$0xf]
        %v371 = vld [vmem:[%s1 + $0x34] sm:$0xf]
        %v372 = vld [vmem:[%s1 + $0x38] sm:$0xf]
        %v373 = vld [vmem:[%s1 + $0x3c] sm:$0xf]
        %v374 = vld [vmem:[%s2] sm:$0x1]
        %v376 = vlaneseq
        %v377 = vshrl.u32 %v376, 7
        %v378 = vsub.s32 0, %v377
        %v379 = vrot.slane %v374, %v378
        %v389 = vunpack.c.l.b16 %v350
        %v390 = vunpack.c.l.b16 %v351
        %v391 = vunpack.c.l.b16 %v352
        %v392 = vunpack.c.l.b16 %v353
        %v393 = vunpack.c.l.b16 %v354
        %v394 = vunpack.c.l.b16 %v355
        %v395 = vunpack.c.l.b16 %v356
        %v396 = vunpack.c.l.b16 %v357
        %v397 = vpack.c.b16 %v390, %v389
        %v398 = vpack.c.b16 %v392, %v391
        %v399 = vpack.c.b16 %v394, %v393
        %v400 = vpack.c.b16 %v396, %v395
        %v421 = vunpack.c.l.b16 %v358
        %v422 = vunpack.c.l.b16 %v359
        %v423 = vunpack.c.l.b16 %v360
        %v424 = vunpack.c.l.b16 %v361
        %v425 = vunpack.c.l.b16 %v362
        %v426 = vunpack.c.l.b16 %v363
        %v427 = vunpack.c.l.b16 %v364
        %v428 = vunpack.c.l.b16 %v365
        %v429 = vunpack.c.l.b16 %v366
        %v430 = vunpack.c.l.b16 %v367
        %v431 = vunpack.c.l.b16 %v368
        %v432 = vunpack.c.l.b16 %v369
        %v433 = vunpack.c.l.b16 %v370
        %v434 = vunpack.c.l.b16 %v371
        %v435 = vunpack.c.l.b16 %v372
        %v436 = vunpack.c.l.b16 %v373
        %v437 = vpack.c.b16 %v422, %v421
        %v438 = vpack.c.b16 %v424, %v423
        %v439 = vpack.c.b16 %v426, %v425
        %v440 = vpack.c.b16 %v428, %v427
        %v441 = vpack.c.b16 %v430, %v429
        %v442 = vpack.c.b16 %v432, %v431
        %v443 = vpack.c.b16 %v434, %v433
        %v444 = vpack.c.b16 %v436, %v435
        %453 = vmatprep.subr.bf16.mxu0 0
        %454 = vmatpush1.bf16.msra.mxu0 %v444
        %455 = vmatprep.subr.bf16.mxu0 0
        %456 = vmatpush1.bf16.msra.mxu0 %v443
        %457 = vmatprep.subr.bf16.mxu0 0
        %458 = vmatpush1.bf16.msra.mxu0 %v442
        %459 = vmatprep.subr.bf16.mxu0 0
        %460 = vmatpush1.bf16.msra.mxu0 %v441
        %461 = vmatprep.subr.bf16.mxu0 0
        %462 = vmatpush1.bf16.msra.mxu0 %v440
        %463 = vmatprep.subr.bf16.mxu0 0
        %464 = vmatpush1.bf16.msra.mxu0 %v439
        %465 = vmatprep.subr.bf16.mxu0 0
        %466 = vmatpush1.bf16.msra.mxu0 %v438
        %467 = vmatprep.subr.bf16.mxu0 0
        %468 = vmatpush1.bf16.msra.mxu0 %v437
        %469 = vmatprep.subr.bf16.mxu0 0
        %470 = vmatpush2.bf16.msra.mxu0 0
        %471 = vmatprep.subr.bf16.mxu0 0
        %472 = vmatpush2.bf16.msra.mxu0 0
        %473 = vmatprep.subr.bf16.mxu0 0
        %474 = vmatpush2.bf16.msra.mxu0 0
        %475 = vmatprep.subr.bf16.mxu0 0
        %476 = vmatpush2.bf16.msra.mxu0 0
        %477 = vmatprep.subr.bf16.mxu0 0
        %478 = vmatpush2.bf16.msra.mxu0 0
        %479 = vmatprep.subr.bf16.mxu0 0
        %480 = vmatpush2.bf16.msra.mxu0 0
        %481 = vmatprep.subr.bf16.mxu0 0
        %482 = vmatpush2.bf16.msra.mxu0 0
        %483 = vmatprep.subr.bf16.mxu0 0
        %484 = vmatpush2.bf16.msra.mxu0 0
        %485 = vmatprep.mubr.bf16.mxu0 0
        %486 = vmatmul.mubr.bf16.gmra.mxu0 %v397
        %v487 = vpop.f32.mrf.mxu0
        %v488 = vadd.f32 %v379, %v487
        %v489 = vpop.f32.mrf.mxu0
        %v490 = vpop.f32.mrf.mxu0
        %v491 = vadd.f32 %v379, %v490
        %v492 = vpop.f32.mrf.mxu0
        %493 = vmatprep.mubr.bf16.mxu0 0
        %494 = vmatmul.mubr.bf16.gmra.mxu0 %v398
        %v495 = vpop.f32.mrf.mxu0
        %v496 = vadd.f32 %v379, %v495
        %v497 = vpop.f32.mrf.mxu0
        %v498 = vpop.f32.mrf.mxu0
        %v499 = vadd.f32 %v379, %v498
        %v500 = vpop.f32.mrf.mxu0
        %501 = vmatprep.mubr.bf16.mxu0 0
        %502 = vmatmul.mubr.bf16.gmra.mxu0 %v399
        %v503 = vpop.f32.mrf.mxu0
        %v504 = vadd.f32 %v379, %v503
        %v505 = vpop.f32.mrf.mxu0
        %v506 = vpop.f32.mrf.mxu0
        %v507 = vadd.f32 %v379, %v506
        %v508 = vpop.f32.mrf.mxu0
        %509 = vmatprep.mubr.bf16.mxu0 0
        %510 = vmatmul.mubr.bf16.gmra.mxu0 %v400
        %v511 = vpop.f32.mrf.mxu0
        %v512 = vadd.f32 %v379, %v511
        %v513 = vpop.f32.mrf.mxu0
        %v514 = vpop.f32.mrf.mxu0
        %v515 = vadd.f32 %v379, %v514
        %v516 = vpop.f32.mrf.mxu0
        %517 = vdwg.mxu0
        %v518 = vmul.f32 %v488, 0.5
        %v519 = vmul.f32 %v491, 0.5
        %v520 = vmul.f32 %v496, 0.5
        %v521 = vmul.f32 %v499, 0.5
        %v522 = vmul.f32 %v504, 0.5
        %v523 = vmul.f32 %v507, 0.5
        %v524 = vmul.f32 %v512, 0.5
        %v525 = vmul.f32 %v515, 0.5
        %v526 = vmul.f32 %v488, 0.70710677
        %v527 = vmul.f32 %v491, 0.70710677
        %v528 = vmul.f32 %v496, 0.70710677
        %v529 = vmul.f32 %v499, 0.70710677
        %v530 = vmul.f32 %v504, 0.70710677
        %v531 = vmul.f32 %v507, 0.70710677
        %v532 = vmul.f32 %v512, 0.70710677
        %v533 = vmul.f32 %v515, 0.70710677
        %v534 = verf.f32.pop %v526
        %v535 = verf.f32.pop %v527
        %v536 = verf.f32.pop %v528
        %v537 = verf.f32.pop %v529
        %v538 = verf.f32.pop %v530
        %v539 = verf.f32.pop %v531
        %v540 = verf.f32.pop %v532
        %v541 = verf.f32.pop %v533
        %v542 = vadd.f32 %v534, 1.0
        %v543 = vadd.f32 %v535, 1.0
        %v544 = vadd.f32 %v536, 1.0
        %v545 = vadd.f32 %v537, 1.0
        %v546 = vadd.f32 %v538, 1.0
        %v547 = vadd.f32 %v539, 1.0
        %v548 = vadd.f32 %v540, 1.0
        %v549 = vadd.f32 %v541, 1.0
        %v550 = vmul.f32 %v518, %v542
        %v551 = vmul.f32 %v519, %v543
        %v552 = vmul.f32 %v520, %v544
        %v553 = vmul.f32 %v521, %v545
        %v554 = vmul.f32 %v522, %v546
        %v555 = vmul.f32 %v523, %v547
        %v556 = vmul.f32 %v524, %v548
        %v557 = vmul.f32 %v525, %v549
        %v558 = vld [vmem:[%s5] sm:$0xff]
        %v559 = vld [vmem:[%s5 + $0x8] sm:$0xff]
        %vm560 = vcmask 523264
        %v562 = vsel %vm560, %v558, 0
        %v565 = vsel %vm560, %v559, 0
        %567 = vmatprep.subr.mxu0 0.0
        %568 = vmatpush1.msra.mxu0 0.0
        %569 = vmatprep.subr.mxu0 0.0
        %570 = vmatpush1.msra.mxu0 0.0
        %571 = vmatprep.subr.mxu0 0.0
        %572 = vmatpush1.msra.mxu0 0.0
        %573 = vmatprep.subr.mxu0 0.0
        %574 = vmatpush1.msra.mxu0 0.0
        %575 = vmatprep.subr.mxu0 0.0
        %576 = vmatpush1.msra.mxu0 0.0
        %577 = vmatprep.subr.mxu0 0.0
        %578 = vmatpush1.msra.mxu0 0.0
        %579 = vmatprep.subr.mxu0 0.0
        %580 = vmatpush1.msra.mxu0 0.0
        %581 = vmatprep.subr.mxu0 0.0
        %582 = vmatpush1.msra.mxu0 0.0
        %583 = vmatprep.subr.mxu0 0.0
        %584 = vmatpush1.msra.mxu0 %v557
        %585 = vmatprep.subr.mxu0 0.0
        %586 = vmatpush1.msra.mxu0 %v556
        %587 = vmatprep.subr.mxu0 0.0
        %588 = vmatpush1.msra.mxu0 %v555
        %589 = vmatprep.subr.mxu0 0.0
        %590 = vmatpush1.msra.mxu0 %v554
        %591 = vmatprep.subr.mxu0 0.0
        %592 = vmatpush1.msra.mxu0 %v553
        %593 = vmatprep.subr.mxu0 0.0
        %594 = vmatpush1.msra.mxu0 %v552
        %595 = vmatprep.subr.mxu0 0.0
        %596 = vmatpush1.msra.mxu0 %v551
        %597 = vmatprep.subr.mxu0 0.0
        %598 = vmatpush1.msra.mxu0 %v550
        %599 = vmatprep.subr.mxu0 0.0
        %600 = vmatpush2.msra.mxu0 0.0
        %601 = vmatprep.subr.mxu0 0.0
        %602 = vmatpush2.msra.mxu0 0.0
        %603 = vmatprep.subr.mxu0 0.0
        %604 = vmatpush2.msra.mxu0 0.0
        %605 = vmatprep.subr.mxu0 0.0
        %606 = vmatpush2.msra.mxu0 0.0
        %607 = vmatprep.subr.mxu0 0.0
        %608 = vmatpush2.msra.mxu0 0.0
        %609 = vmatprep.subr.mxu0 0.0
        %610 = vmatpush2.msra.mxu0 0.0
        %611 = vmatprep.subr.mxu0 0.0
        %612 = vmatpush2.msra.mxu0 0.0
        %613 = vmatprep.subr.mxu0 0.0
        %614 = vmatpush2.msra.mxu0 0.0
        %615 = vmatprep.subr.mxu0 0.0
        %616 = vmatpush2.msra.mxu0 0.0
        %617 = vmatprep.subr.mxu0 0.0
        %618 = vmatpush2.msra.mxu0 0.0
        %619 = vmatprep.subr.mxu0 0.0
        %620 = vmatpush2.msra.mxu0 0.0
        %621 = vmatprep.subr.mxu0 0.0
        %622 = vmatpush2.msra.mxu0 0.0
        %623 = vmatprep.subr.mxu0 0.0
        %624 = vmatpush2.msra.mxu0 0.0
        %625 = vmatprep.subr.mxu0 0.0
        %626 = vmatpush2.msra.mxu0 0.0
        %627 = vmatprep.subr.mxu0 0.0
        %628 = vmatpush2.msra.mxu0 0.0
        %629 = vmatprep.subr.mxu0 0.0
        %630 = vmatpush2.msra.mxu0 0.0
        %631 = vmatprep.mubr.f32.mxu0 0.0
        %632 = vmatmul.mubr.f32.gmra.mxu0 %v562
        %v633 = vpop.f32.mrf.mxu0
        %v634 = vadd.f32 0.0, %v633
        %v635 = vpop.f32.mrf.mxu0
        %636 = vmatprep.mubr.f32.mxu0 0.0
        %637 = vmatmul.mubr.f32.gmra.mxu0 %v565
        %v638 = vpop.f32.mrf.mxu0
        %v639 = vadd.f32 0.0, %v638
        %v640 = vpop.f32.mrf.mxu0
        %641 = vdwg.mxu0
        %v642 = vpack.c.bf16 %v639, %v634
        %v643 = vld [vmem:[#allocation2] sm:$0xf]
        %v644 = vld [vmem:[#allocation2 + $0x4] sm:$0xf]
        %v645 = vld [vmem:[#allocation2 + $0x8] sm:$0xf]
        %v646 = vld [vmem:[#allocation2 + $0xc] sm:$0xf]
        %v647 = vld [vmem:[#allocation2 + $0x10] sm:$0xf]
        %v648 = vld [vmem:[#allocation2 + $0x14] sm:$0xf]
        %v649 = vld [vmem:[#allocation2 + $0x18] sm:$0xf]
        %v650 = vld [vmem:[#allocation2 + $0x1c] sm:$0xf]
        %v651 = vld [vmem:[#allocation2 + $0x20] sm:$0xf]
        %v652 = vld [vmem:[#allocation2 + $0x24] sm:$0xf]
        %v653 = vld [vmem:[#allocation2 + $0x28] sm:$0xf]
        %v654 = vld [vmem:[#allocation2 + $0x2c] sm:$0xf]
        %v655 = vld [vmem:[#allocation2 + $0x30] sm:$0xf]
        %v656 = vld [vmem:[#allocation2 + $0x34] sm:$0xf]
        %v657 = vld [vmem:[#allocation2 + $0x38] sm:$0xf]
        %v658 = vld [vmem:[#allocation2 + $0x3c] sm:$0xf]
        %v659 = vld [vmem:[%s4] sm:$0x1]
        %v661 = vlaneseq
        %v662 = vshrl.u32 %v661, 7
        %v663 = vsub.s32 0, %v662
        %v664 = vrot.slane %v659, %v663
        %v682 = vunpack.c.l.b16 %v643
        %v683 = vunpack.c.l.b16 %v644
        %v684 = vunpack.c.l.b16 %v645
        %v685 = vunpack.c.l.b16 %v646
        %v686 = vunpack.c.l.b16 %v647
        %v687 = vunpack.c.l.b16 %v648
        %v688 = vunpack.c.l.b16 %v649
        %v689 = vunpack.c.l.b16 %v650
        %v690 = vunpack.c.l.b16 %v651
        %v691 = vunpack.c.l.b16 %v652
        %v692 = vunpack.c.l.b16 %v653
        %v693 = vunpack.c.l.b16 %v654
        %v694 = vunpack.c.l.b16 %v655
        %v695 = vunpack.c.l.b16 %v656
        %v696 = vunpack.c.l.b16 %v657
        %v697 = vunpack.c.l.b16 %v658
        %v698 = vpack.c.b16 %v683, %v682
        %v699 = vpack.c.b16 %v685, %v684
        %v700 = vpack.c.b16 %v687, %v686
        %v701 = vpack.c.b16 %v689, %v688
        %v702 = vpack.c.b16 %v691, %v690
        %v703 = vpack.c.b16 %v693, %v692
        %v704 = vpack.c.b16 %v695, %v694
        %v705 = vpack.c.b16 %v697, %v696
        %714 = vmatprep.subr.bf16.mxu0 0
        %715 = vmatpush1.bf16.msra.mxu0 %v705
        %716 = vmatprep.subr.bf16.mxu0 0
        %717 = vmatpush1.bf16.msra.mxu0 %v704
        %718 = vmatprep.subr.bf16.mxu0 0
        %719 = vmatpush1.bf16.msra.mxu0 %v703
        %720 = vmatprep.subr.bf16.mxu0 0
        %721 = vmatpush1.bf16.msra.mxu0 %v702
        %722 = vmatprep.subr.bf16.mxu0 0
        %723 = vmatpush1.bf16.msra.mxu0 %v701
        %724 = vmatprep.subr.bf16.mxu0 0
        %725 = vmatpush1.bf16.msra.mxu0 %v700
        %726 = vmatprep.subr.bf16.mxu0 0
        %727 = vmatpush1.bf16.msra.mxu0 %v699
        %728 = vmatprep.subr.bf16.mxu0 0
        %729 = vmatpush1.bf16.msra.mxu0 %v698
        %730 = vmatprep.subr.bf16.mxu0 0
        %731 = vmatpush2.bf16.msra.mxu0 0
        %732 = vmatprep.subr.bf16.mxu0 0
        %733 = vmatpush2.bf16.msra.mxu0 0
        %734 = vmatprep.subr.bf16.mxu0 0
        %735 = vmatpush2.bf16.msra.mxu0 0
        %736 = vmatprep.subr.bf16.mxu0 0
        %737 = vmatpush2.bf16.msra.mxu0 0
        %738 = vmatprep.subr.bf16.mxu0 0
        %739 = vmatpush2.bf16.msra.mxu0 0
        %740 = vmatprep.subr.bf16.mxu0 0
        %741 = vmatpush2.bf16.msra.mxu0 0
        %742 = vmatprep.subr.bf16.mxu0 0
        %743 = vmatpush2.bf16.msra.mxu0 0
        %744 = vmatprep.subr.bf16.mxu0 0
        %745 = vmatpush2.bf16.msra.mxu0 0
        %746 = vmatprep.mubr.bf16.mxu0 0
        %747 = vmatmul.mubr.bf16.gmra.mxu0 %v642
        %v748 = vpop.f32.mrf.mxu0
        %v749 = vadd.f32 %v664, %v748
        %v750 = vpop.f32.mrf.mxu0
        %v751 = vpop.f32.mrf.mxu0
        %v752 = vadd.f32 %v664, %v751
        %v753 = vpop.f32.mrf.mxu0
        %754 = vdwg.mxu0
        %v755 = vld [vmem:[%s6] sm:$0xff]
        %v756 = vld [vmem:[%s6 + $0x8] sm:$0xff]
        %v757 = vld [vmem:[%s6 + $0x10] sm:$0xff]
        %v758 = vld [vmem:[%s6 + $0x18] sm:$0xff]
        %v759 = vld [vmem:[%s6 + $0x20] sm:$0xff]
        %v760 = vld [vmem:[%s6 + $0x28] sm:$0xff]
        %v761 = vld [vmem:[%s6 + $0x30] sm:$0xff]
        %v762 = vld [vmem:[%s6 + $0x38] sm:$0xff]
        %v763 = vld [vmem:[%s6 + $0x40] sm:$0xff]
        %v764 = vld [vmem:[%s6 + $0x48] sm:$0xff]
        %v765 = vld [vmem:[%s6 + $0x50] sm:$0xff]
        %v766 = vld [vmem:[%s6 + $0x58] sm:$0xff]
        %v767 = vld [vmem:[%s6 + $0x60] sm:$0xff]
        %v768 = vld [vmem:[%s6 + $0x68] sm:$0xff]
        %v769 = vld [vmem:[%s6 + $0x70] sm:$0xff]
        %v770 = vld [vmem:[%s6 + $0x78] sm:$0xff]
        %v771 = vld [vmem:[%s6 + $0x80] sm:$0xff]
        %v772 = vld [vmem:[%s6 + $0x88] sm:$0xff]
        %vm773 = vcmask 130048
        %v775 = vsel %vm773, %v755, 0
        %v778 = vsel %vm773, %v756, 0
        %v781 = vsel %vm773, %v757, 0
        %v784 = vsel %vm773, %v758, 0
        %v787 = vsel %vm773, %v759, 0
        %v790 = vsel %vm773, %v760, 0
        %v793 = vsel %vm773, %v761, 0
        %v796 = vsel %vm773, %v762, 0
        %v799 = vsel %vm773, %v763, 0
        %v802 = vsel %vm773, %v764, 0
        %v805 = vsel %vm773, %v765, 0
        %v808 = vsel %vm773, %v766, 0
        %v811 = vsel %vm773, %v767, 0
        %v814 = vsel %vm773, %v768, 0
        %v817 = vsel %vm773, %v769, 0
        %v820 = vsel %vm773, %v770, 0
        %v823 = vsel %vm773, %v771, 0
        %v826 = vsel %vm773, %v772, 0
        %828 = vmatprep.subr.mxu0 0.0
        %829 = vmatpush1.msra.mxu0 0.0
        %830 = vmatprep.subr.mxu0 0.0
        %831 = vmatpush1.msra.mxu0 0.0
        %832 = vmatprep.subr.mxu0 0.0
        %833 = vmatpush1.msra.mxu0 0.0
        %834 = vmatprep.subr.mxu0 0.0
        %835 = vmatpush1.msra.mxu0 0.0
        %836 = vmatprep.subr.mxu0 0.0
        %837 = vmatpush1.msra.mxu0 0.0
        %838 = vmatprep.subr.mxu0 0.0
        %839 = vmatpush1.msra.mxu0 0.0
        %840 = vmatprep.subr.mxu0 0.0
        %841 = vmatpush1.msra.mxu0 0.0
        %842 = vmatprep.subr.mxu0 0.0
        %843 = vmatpush1.msra.mxu0 0.0
        %844 = vmatprep.subr.mxu0 0.0
        %845 = vmatpush1.msra.mxu0 0.0
        %846 = vmatprep.subr.mxu0 0.0
        %847 = vmatpush1.msra.mxu0 0.0
        %848 = vmatprep.subr.mxu0 0.0
        %849 = vmatpush1.msra.mxu0 0.0
        %850 = vmatprep.subr.mxu0 0.0
        %851 = vmatpush1.msra.mxu0 0.0
        %852 = vmatprep.subr.mxu0 0.0
        %853 = vmatpush1.msra.mxu0 0.0
        %854 = vmatprep.subr.mxu0 0.0
        %855 = vmatpush1.msra.mxu0 0.0
        %856 = vmatprep.subr.mxu0 0.0
        %857 = vmatpush1.msra.mxu0 %v752
        %858 = vmatprep.subr.mxu0 0.0
        %859 = vmatpush1.msra.mxu0 %v749
        %860 = vmatprep.subr.mxu0 0.0
        %861 = vmatpush2.msra.mxu0 0.0
        %862 = vmatprep.subr.mxu0 0.0
        %863 = vmatpush2.msra.mxu0 0.0
        %864 = vmatprep.subr.mxu0 0.0
        %865 = vmatpush2.msra.mxu0 0.0
        %866 = vmatprep.subr.mxu0 0.0
        %867 = vmatpush2.msra.mxu0 0.0
        %868 = vmatprep.subr.mxu0 0.0
        %869 = vmatpush2.msra.mxu0 0.0
        %870 = vmatprep.subr.mxu0 0.0
        %871 = vmatpush2.msra.mxu0 0.0
        %872 = vmatprep.subr.mxu0 0.0
        %873 = vmatpush2.msra.mxu0 0.0
        %874 = vmatprep.subr.mxu0 0.0
        %875 = vmatpush2.msra.mxu0 0.0
        %876 = vmatprep.subr.mxu0 0.0
        %877 = vmatpush2.msra.mxu0 0.0
        %878 = vmatprep.subr.mxu0 0.0
        %879 = vmatpush2.msra.mxu0 0.0
        %880 = vmatprep.subr.mxu0 0.0
        %881 = vmatpush2.msra.mxu0 0.0
        %882 = vmatprep.subr.mxu0 0.0
        %883 = vmatpush2.msra.mxu0 0.0
        %884 = vmatprep.subr.mxu0 0.0
        %885 = vmatpush2.msra.mxu0 0.0
        %886 = vmatprep.subr.mxu0 0.0
        %887 = vmatpush2.msra.mxu0 0.0
        %888 = vmatprep.subr.mxu0 0.0
        %889 = vmatpush2.msra.mxu0 0.0
        %890 = vmatprep.subr.mxu0 0.0
        %891 = vmatpush2.msra.mxu0 0.0
        %892 = vmatprep.mubr.f32.mxu0 0.0
        %893 = vmatmul.mubr.f32.gmra.mxu0 %v775
        %v894 = vpop.f32.mrf.mxu0
        %v895 = vadd.f32 0.0, %v894
        %v896 = vpop.f32.mrf.mxu0
        %897 = vmatprep.mubr.f32.mxu0 0.0
        %898 = vmatmul.mubr.f32.gmra.mxu0 %v778
        %v899 = vpop.f32.mrf.mxu0
        %v900 = vadd.f32 0.0, %v899
        %v901 = vpop.f32.mrf.mxu0
        %902 = vmatprep.mubr.f32.mxu0 0.0
        %903 = vmatmul.mubr.f32.gmra.mxu0 %v781
        %v904 = vpop.f32.mrf.mxu0
        %v905 = vadd.f32 0.0, %v904
        %v906 = vpop.f32.mrf.mxu0
        %907 = vmatprep.mubr.f32.mxu0 0.0
        %908 = vmatmul.mubr.f32.gmra.mxu0 %v784
        %v909 = vpop.f32.mrf.mxu0
        %v910 = vadd.f32 0.0, %v909
        %v911 = vpop.f32.mrf.mxu0
        %912 = vmatprep.mubr.f32.mxu0 0.0
        %913 = vmatmul.mubr.f32.gmra.mxu0 %v787
        %v914 = vpop.f32.mrf.mxu0
        %v915 = vadd.f32 0.0, %v914
        %v916 = vpop.f32.mrf.mxu0
        %917 = vmatprep.mubr.f32.mxu0 0.0
        %918 = vmatmul.mubr.f32.gmra.mxu0 %v790
        %v919 = vpop.f32.mrf.mxu0
        %v920 = vadd.f32 0.0, %v919
        %v921 = vpop.f32.mrf.mxu0
        %922 = vmatprep.mubr.f32.mxu0 0.0
        %923 = vmatmul.mubr.f32.gmra.mxu0 %v793
        %v924 = vpop.f32.mrf.mxu0
        %v925 = vadd.f32 0.0, %v924
        %v926 = vpop.f32.mrf.mxu0
        %927 = vmatprep.mubr.f32.mxu0 0.0
        %928 = vmatmul.mubr.f32.gmra.mxu0 %v796
        %v929 = vpop.f32.mrf.mxu0
        %v930 = vadd.f32 0.0, %v929
        %v931 = vpop.f32.mrf.mxu0
        %932 = vmatprep.mubr.f32.mxu0 0.0
        %933 = vmatmul.mubr.f32.gmra.mxu0 %v799
        %v934 = vpop.f32.mrf.mxu0
        %v935 = vadd.f32 0.0, %v934
        %v936 = vpop.f32.mrf.mxu0
        %937 = vmatprep.mubr.f32.mxu0 0.0
        %938 = vmatmul.mubr.f32.gmra.mxu0 %v802
        %v939 = vpop.f32.mrf.mxu0
        %v940 = vadd.f32 0.0, %v939
        %v941 = vpop.f32.mrf.mxu0
        %942 = vmatprep.mubr.f32.mxu0 0.0
        %943 = vmatmul.mubr.f32.gmra.mxu0 %v805
        %v944 = vpop.f32.mrf.mxu0
        %v945 = vadd.f32 0.0, %v944
        %v946 = vpop.f32.mrf.mxu0
        %947 = vmatprep.mubr.f32.mxu0 0.0
        %948 = vmatmul.mubr.f32.gmra.mxu0 %v808
        %v949 = vpop.f32.mrf.mxu0
        %v950 = vadd.f32 0.0, %v949
        %v951 = vpop.f32.mrf.mxu0
        %952 = vmatprep.mubr.f32.mxu0 0.0
        %953 = vmatmul.mubr.f32.gmra.mxu0 %v811
        %v954 = vpop.f32.mrf.mxu0
        %v955 = vadd.f32 0.0, %v954
        %v956 = vpop.f32.mrf.mxu0
        %957 = vmatprep.mubr.f32.mxu0 0.0
        %958 = vmatmul.mubr.f32.gmra.mxu0 %v814
        %v959 = vpop.f32.mrf.mxu0
        %v960 = vadd.f32 0.0, %v959
        %v961 = vpop.f32.mrf.mxu0
        %962 = vmatprep.mubr.f32.mxu0 0.0
        %963 = vmatmul.mubr.f32.gmra.mxu0 %v817
        %v964 = vpop.f32.mrf.mxu0
        %v965 = vadd.f32 0.0, %v964
        %v966 = vpop.f32.mrf.mxu0
        %967 = vmatprep.mubr.f32.mxu0 0.0
        %968 = vmatmul.mubr.f32.gmra.mxu0 %v820
        %v969 = vpop.f32.mrf.mxu0
        %v970 = vadd.f32 0.0, %v969
        %v971 = vpop.f32.mrf.mxu0
        %972 = vmatprep.mubr.f32.mxu0 0.0
        %973 = vmatmul.mubr.f32.gmra.mxu0 %v823
        %v974 = vpop.f32.mrf.mxu0
        %v975 = vadd.f32 0.0, %v974
        %v976 = vpop.f32.mrf.mxu0
        %977 = vmatprep.mubr.f32.mxu0 0.0
        %978 = vmatmul.mubr.f32.gmra.mxu0 %v826
        %v979 = vpop.f32.mrf.mxu0
        %v980 = vadd.f32 0.0, %v979
        %v981 = vpop.f32.mrf.mxu0
        %982 = vdwg.mxu0
        %v983 = vld [vmem:[%s7] sm:$0xff]
        %v984 = vld [vmem:[%s7 + $0x8] sm:$0x1]
        %v985 = vld [vmem:[%s8] sm:$0x1]
        %v987 = vlaneseq
        %v988 = vshrl.u32 %v987, 7
        %v989 = vsub.s32 0, %v988
        %v990 = vrot.slane %v985, %v989
        %v992 = vadd.f32 %v749, %v990
        %v993 = vadd.f32 %v752, %v990
        %v994 = vlaneseq
        %v995 = vshrl.u32 %v994, 7
        %v996 = vsub.s32 0, %v995
        %v997 = vrot.slane %v983, %v996
        %v998 = vmul.f32 %v895, %v997
        %v999 = vmul.f32 %v900, %v997
        %v1000 = vadd.f32 %v992, %v998
        %v1001 = vadd.f32 %v993, %v999
        %v1002 = vlaneseq
        %v1003 = vshrl.u32 %v1002, 7
        %v1004 = vsub.s32 1, %v1003
        %v1005 = vrot.slane %v983, %v1004
        %v1006 = vmul.f32 %v905, %v1005
        %v1007 = vmul.f32 %v910, %v1005
        %v1008 = vadd.f32 %v1000, %v1006
        %v1009 = vadd.f32 %v1001, %v1007
        %v1010 = vlaneseq
        %v1011 = vshrl.u32 %v1010, 7
        %v1012 = vsub.s32 2, %v1011
        %v1013 = vrot.slane %v983, %v1012
        %v1014 = vmul.f32 %v915, %v1013
        %v1015 = vmul.f32 %v920, %v1013
        %v1016 = vadd.f32 %v1008, %v1014
        %v1017 = vadd.f32 %v1009, %v1015
        %v1018 = vlaneseq
        %v1019 = vshrl.u32 %v1018, 7
        %v1020 = vsub.s32 3, %v1019
        %v1021 = vrot.slane %v983, %v1020
        %v1022 = vmul.f32 %v925, %v1021
        %v1023 = vmul.f32 %v930, %v1021
        %v1024 = vadd.f32 %v1016, %v1022
        %v1025 = vadd.f32 %v1017, %v1023
        %v1026 = vlaneseq
        %v1027 = vshrl.u32 %v1026, 7
        %v1028 = vsub.s32 4, %v1027
        %v1029 = vrot.slane %v983, %v1028
        %v1030 = vmul.f32 %v935, %v1029
        %v1031 = vmul.f32 %v940, %v1029
        %v1032 = vadd.f32 %v1024, %v1030
        %v1033 = vadd.f32 %v1025, %v1031
        %v1034 = vlaneseq
        %v1035 = vshrl.u32 %v1034, 7
        %v1036 = vsub.s32 5, %v1035
        %v1037 = vrot.slane %v983, %v1036
        %v1038 = vmul.f32 %v945, %v1037
        %v1039 = vmul.f32 %v950, %v1037
        %v1040 = vadd.f32 %v1032, %v1038
        %v1041 = vadd.f32 %v1033, %v1039
        %v1042 = vlaneseq
        %v1043 = vshrl.u32 %v1042, 7
        %v1044 = vsub.s32 6, %v1043
        %v1045 = vrot.slane %v983, %v1044
        %v1046 = vmul.f32 %v955, %v1045
        %v1047 = vmul.f32 %v960, %v1045
        %v1048 = vadd.f32 %v1040, %v1046
        %v1049 = vadd.f32 %v1041, %v1047
        %v1050 = vlaneseq
        %v1051 = vshrl.u32 %v1050, 7
        %v1052 = vsub.s32 7, %v1051
        %v1053 = vrot.slane %v983, %v1052
        %v1054 = vmul.f32 %v965, %v1053
        %v1055 = vmul.f32 %v970, %v1053
        %v1056 = vadd.f32 %v1048, %v1054
        %v1057 = vadd.f32 %v1049, %v1055
        %v1058 = vlaneseq
        %v1059 = vshrl.u32 %v1058, 7
        %v1060 = vsub.s32 0, %v1059
        %v1061 = vrot.slane %v984, %v1060
        %v1062 = vmul.f32 %v975, %v1061
        %v1063 = vmul.f32 %v980, %v1061
        %v1064 = vadd.f32 %v1056, %v1062
        %v1065 = vadd.f32 %v1057, %v1063
        %1066 = vst [vmem:[%s341] sm:$0xff] %v1064
        %1067 = vst [vmem:[%s341 + $0x8] sm:$0xff] %v1065
        %s1068 = sand.u32 %s226, 1
        %s1069 = scalar_lea.sflag [#allocation4], %s1068
        %s1070 = sand.u32 %s226, 1
        %s1071 = smul.addr %s1070, 16
        %s1072 = scalar_lea.vmem [#allocation5], %s1071
        // Predicated region
        $region61: #{tpu_custom_call.1} parent=55 // pred_check
          %p1073 = pneg %p236
        $region62: #{tpu_custom_call.1} parent=55 // pred_check_branch
          %1075 = sbr.rel (%p1073) target = $region64
        $region63: #{tpu_custom_call.1} parent=55 // pred_region
          %s1076 = smul.u32 2, %s24
          %s1078 = ssub.s32 256, 256
          %1079 = vsyncadd %s1069, %s1078
          %s1080 = smul.addr %s1076, 128
          %s1081 = scalar_lea.hbm %s9, %s1080
          %s1082 = sshll.u32 %s1072, 4
          %s1083 = int_to_ptr.vmem [resolvable:$true] %s1082
          %1088 = dma.vmem_to_hbm [thread:$0]  %s1083, 256, %s1081, %s1069, 128, 128, 8
        $region64: #{tpu_custom_call.1} parent=55 // pred_fallthru
          _
      $region56: #{tpu_custom_call.1} parent=5 // pred_fallthru
        _
      %p1089 = scmp.le.s32.totalorder 2, %s19
      // Predicated region
      $region65: #{tpu_custom_call.1} parent=5 // pred_check
        %p1090 = pneg %p1089
      $region66: #{tpu_custom_call.1} parent=5 // pred_check_branch
        %1092 = sbr.rel (%p1090) target = $region68
      $region67: #{tpu_custom_call.1} parent=5 // pred_region
        %s1093 = ssub.s32 %s19, 2
        // Predicated region
        $region69: #{tpu_custom_call.1} parent=67 // pred_check
          %p1094 = pneg %p242
        $region70: #{tpu_custom_call.1} parent=67 // pred_check_branch
          %1096 = sbr.rel (%p1094) target = $region72
        $region71: #{tpu_custom_call.1} parent=67 // pred_region
          %s1097 = sand.u32 %s227, 1
          %s1098 = scalar_lea.sflag [#allocation4], %s1097
          %s1099 = sand.u32 %s227, 1
          %s1100 = smul.addr %s1099, 16
          %s1101 = scalar_lea.vmem [#allocation5], %s1100
          %1102 = dma.done %s1098, 256
        $region72: #{tpu_custom_call.1} parent=67 // pred_fallthru
          _
      $region68: #{tpu_custom_call.1} parent=5 // pred_fallthru
        _
    $region6: #{tpu_custom_call.1} parent=1 // loop_footer
      %s23 = sadd.s32 1, %s19
    $region7: #{tpu_custom_call.1} parent=1 // loop_footer_branch
      %18 = sbr.rel target = $region3
    $region8: #{tpu_custom_call.1} parent=1 // loop_exit
      _
    %1103 = vsyncpa [#allocation3], 1
    %s1104 = scalar_lea.sflag [#allocation3], 1
    %1105 = vsyncpa %s1104, 1
    %1106 = vsyncpa [#allocation4], 1
    %s1107 = scalar_lea.sflag [#allocation4], 1
    %1108 = vsyncpa %s1107, 1

</llo_original>
